<compile_context>
chip_gen: v7x
topology: tpu7x:2x2x1
jax: 0.10.0
libtpu: 0.0.40
codegen_flags: <defaults>
</compile_context>

<pallas_src>
import jax
import jax.numpy as jnp
from jax import lax
from jax.experimental import pallas as pl
from jax.experimental.pallas import tpu as pltpu


def _round_up(v: int, m: int) -> int:
    return ((v + m - 1) // m) * m


def _vmem_limit_bytes() -> int:
    """Per-chip scoped-VMEM budget, leaving headroom below physical capacity.

    v5e/v6e: 128 MiB physical -> ~96 MiB scoped; v7x: 64 MiB -> ~48 MiB.
    """
    try:
        phys = pltpu.get_tpu_info().vmem_capacity_bytes
    except Exception:  # info unavailable at trace time -> conservative default
        phys = 64 << 20
    return max(32 << 20, min(phys - (16 << 20), 96 << 20))


# Contract last dim of x (K) with last dim of w (K): weight keeps its native
# (N, K) nn.Linear layout, so no transpose is ever materialized in HBM.
_TRANS_B_DIMS = (((1,), (1,)), ((), ()))

# Total-bytes threshold below which the gridless, fully VMEM-resident path is
# used (x + w + out comfortably fit with room to spare on every generation).
_SMALL_FOOTPRINT_BYTES = 4 << 20


# ---------------------------------------------------------------------------
# Small-shape path: gridless, everything VMEM-resident, single MXU dot.
# ---------------------------------------------------------------------------
def _linear_small_kernel(x_ref, w_ref, o_ref):
    # x_ref: (B, K), w_ref: (N, K) -> contract K against K (trans_b form).
    o_ref[...] = lax.dot_general(
        x_ref[...], w_ref[...], _TRANS_B_DIMS,
        preferred_element_type=jnp.float32,
    ).astype(o_ref.dtype)


def _linear_small(x, w):
    B, _ = x.shape
    N, _ = w.shape
    return pl.pallas_call(
        _linear_small_kernel,
        out_shape=jax.ShapeDtypeStruct((B, N), x.dtype),
        in_specs=[
            pl.BlockSpec(memory_space=pltpu.MemorySpace.VMEM),
            pl.BlockSpec(memory_space=pltpu.MemorySpace.VMEM),
        ],
        out_specs=pl.BlockSpec(memory_space=pltpu.MemorySpace.VMEM),
    )(x, w)


# ---------------------------------------------------------------------------
# Large-shape path: tiled matmul (k-last grid), weight tiled in (N, K) layout.
# ---------------------------------------------------------------------------
def _linear_tiled_kernel_f32(x_ref, w_ref, o_ref):
    # f32 output: the output block is resident across the k axis (its index_map
    # ignores k), so accumulate directly into o_ref — no scratch, no final copy.
    @pl.when(pl.program_id(2) == 0)
    def _():
        o_ref[...] = jnp.zeros_like(o_ref)

    o_ref[...] += lax.dot_general(
        x_ref[...], w_ref[...], _TRANS_B_DIMS,
        preferred_element_type=jnp.float32,
    )


def _linear_tiled_kernel_acc(x_ref, w_ref, o_ref, acc_ref):
    # Narrower output dtypes: accumulate in an f32 VMEM scratch, cast at the end.
    @pl.when(pl.program_id(2) == 0)
    def _():
        acc_ref[...] = jnp.zeros_like(acc_ref)

    acc_ref[...] += lax.dot_general(
        x_ref[...], w_ref[...], _TRANS_B_DIMS,
        preferred_element_type=jnp.float32,
    )

    @pl.when(pl.program_id(2) == pl.num_programs(2) - 1)
    def _():
        o_ref[...] = acc_ref[...].astype(o_ref.dtype)


def _linear_tiled(x, w, *, tm, tn, tk):
    M, K = x.shape
    N, _ = w.shape
    out_dtype = x.dtype
    itemsize = jnp.dtype(out_dtype).itemsize

    # Clamp tiles to the (rounded-up) problem dims while keeping TPU layout
    # constraints: sublane dims multiples of 8, lane dims multiples of 128.
    tm = min(tm, _round_up(M, 8))
    tn = min(tn, _round_up(N, 128))
    tk = min(tk, _round_up(K, 128))

    # v7x has 2 TensorCores that shard the "parallel" grid axes; if the
    # parallel extent would be 1, split M so both TCs get work (harmless on
    # single-TC v5e/v6e).
    if pl.cdiv(M, tm) * pl.cdiv(N, tn) < 2:
        half_m = _round_up(pl.cdiv(M, 2), 8)
        if 8 <= half_m < tm:
            tm = half_m

    # Zero-pad to tile multiples (only when needed). K-padding contributes
    # zeros to the contraction; M/N padding is sliced off after the kernel.
    Mp, Np, Kp = _round_up(M, tm), _round_up(N, tn), _round_up(K, tk)
    xp = x if (Mp == M and Kp == K) else jnp.pad(x, ((0, Mp - M), (0, Kp - K)))
    wp = w if (Np == N and Kp == K) else jnp.pad(w, ((0, Np - N), (0, Kp - K)))

    if out_dtype == jnp.float32:
        kernel = _linear_tiled_kernel_f32
        scratch = []
    else:
        kernel = _linear_tiled_kernel_acc
        scratch = [pltpu.VMEM((tm, tn), jnp.float32)]

    out = pl.pallas_call(
        kernel,
        out_shape=jax.ShapeDtypeStruct((Mp, Np), out_dtype),
        grid_spec=pltpu.PrefetchScalarGridSpec(
            num_scalar_prefetch=0,
            grid=(Mp // tm, Np // tn, Kp // tk),
            in_specs=[
                pl.BlockSpec((tm, tk), lambda i, j, k: (i, k)),
                # Weight tiled in its NATIVE (N, K) layout: no HBM transpose;
                # per-tile transposed-RHS handling lands on the XLU and hides
                # under the MXU.
                pl.BlockSpec((tn, tk), lambda i, j, k: (j, k)),
            ],
            out_specs=pl.BlockSpec((tm, tn), lambda i, j, k: (i, j)),
            scratch_shapes=scratch,
        ),
        compiler_params=pltpu.CompilerParams(
            # M/N parallel (shards across v7x's 2 TCs; no-op on v5e/v6e),
            # reduction axis k last and "arbitrary".
            dimension_semantics=("parallel", "parallel", "arbitrary"),
            vmem_limit_bytes=_vmem_limit_bytes(),
        ),
        cost_estimate=pl.CostEstimate(
            flops=2 * Mp * Np * Kp,
            transcendentals=0,
            bytes_accessed=(Mp * Kp + Np * Kp + Mp * Np) * itemsize,
        ),
    )(xp, wp)

    if Mp != M or Np != N:
        out = out[:M, :N]
    return out


def dummy_linear_forward(
    x, weights, weight_scale=None, weight_zero_point=None, *, tm=256, tn=512, tk=512
):
    """Pallas equivalent of DummyLinearModel.forward.

    weight_scale / weight_zero_point are accepted for API parity but, exactly
    like the PyTorch module, do not participate in the forward computation.
    """
    del weight_scale, weight_zero_point  # stored-only params in the reference
    M, K = x.shape
    N, K2 = weights.shape
    assert K == K2, "in_features mismatch"

    itemsize = jnp.dtype(x.dtype).itemsize
    footprint = (M * K + N * K + M * N) * itemsize
    if footprint <= _SMALL_FOOTPRINT_BYTES:
        # Tiny problem: single VMEM-resident block, no grid/pipeline machinery.
        return _linear_small(x, weights)
    return _linear_tiled(x, weights, tm=tm, tn=tn, tk=tk)


if __name__ == "__main__":
    key = jax.random.PRNGKey(0)
    k_x, k_w, k_x2, k_w2, k_x3, k_w3 = jax.random.split(key, 6)

    def rel_err(a, b):
        a = a.astype(jnp.float32)
        b = b.astype(jnp.float32)
        return float(jnp.linalg.norm(a - b) / (jnp.linalg.norm(b) + 1e-12))

    # 1) Small shapes matching the module's toy usage -> gridless VMEM path.
    batch, in_features, out_features = 8, 32, 64
    x = jax.random.normal(k_x, (batch, in_features), dtype=jnp.float32)
    weights = jax.random.normal(k_w, (out_features, in_features), dtype=jnp.float32)
    weight_scale = jnp.float32(0.02)      # stored-only, unused in forward
    weight_zero_point = jnp.int32(0)      # stored-only, unused in forward

    y = dummy_linear_forward(x, weights, weight_scale, weight_zero_point)
    jax.block_until_ready(y)
    y_ref = lax.dot_general(x, weights, _TRANS_B_DIMS, precision=lax.Precision.HIGHEST)
    assert y.shape == (batch, out_features)
    # Relative-error check (immune to MXU multi-pass f32 precision, still
    # catches any tiling / accumulation bug — those produce O(1) errors).
    assert rel_err(y, y_ref) < 2e-2

    # 2) Large, tile-aligned shape -> tiled path, grid (2, 2, 2), no padding.
    x2 = jax.random.normal(k_x2, (512, 1024), dtype=jnp.float32)
    w2 = jax.random.normal(k_w2, (1024, 1024), dtype=jnp.float32)
    y2 = dummy_linear_forward(x2, w2)
    jax.block_until_ready(y2)
    y2_ref = lax.dot_general(x2, w2, _TRANS_B_DIMS, precision=lax.Precision.HIGHEST)
    assert y2.shape == (512, 1024)
    assert rel_err(y2, y2_ref) < 2e-2

    # 3) Large, NON-aligned shape -> tiled path with zero-padding + unpad slice
    #    (previously this would have hit the gridless path and risked VMEM OOM).
    x3 = jax.random.normal(k_x3, (520, 780), dtype=jnp.float32)
    w3 = jax.random.normal(k_w3, (1050, 780), dtype=jnp.float32)
    y3 = dummy_linear_forward(x3, w3)
    jax.block_until_ready(y3)
    y3_ref = lax.dot_general(x3, w3, _TRANS_B_DIMS, precision=lax.Precision.HIGHEST)
    assert y3.shape == (520, 1050)
    assert rel_err(y3, y3_ref) < 2e-2

    print("KERNEL_OK")
</pallas_src>

<mosaic_0001>
module attributes {stable_mosaic.version = 11 : i64} {
  func.func @_linear_small_kernel(%arg0: memref<8x32xf32, #tpu.memory_space<vmem>>, %arg1: memref<64x32xf32, #tpu.memory_space<vmem>>, %arg2: memref<8x64xf32, #tpu.memory_space<vmem>>) attributes {dimension_semantics = [], scalar_prefetch = 0 : i64, scratch_operands = 0 : i64, tpu.core_type = #tpu.core_type<tc>} {
    %c0 = arith.constant 0 : index
    %c0_0 = arith.constant 0 : index
    %0 = vector.load %arg0[%c0, %c0_0] : memref<8x32xf32, #tpu.memory_space<vmem>>, vector<8x32xf32>
    %c0_1 = arith.constant 0 : index
    %c0_2 = arith.constant 0 : index
    %1 = vector.load %arg1[%c0_1, %c0_2] : memref<64x32xf32, #tpu.memory_space<vmem>>, vector<64x32xf32>
    %cst = arith.constant dense<0.000000e+00> : vector<8x64xf32>
    %2 = tpu.matmul %0, %1, %cst {dimension_numbers = #tpu.dot_dimension_numbers<[1], [1], [0], [0], [0, 0, 1, 0], [], []>} : vector<8x32xf32>, vector<64x32xf32>, vector<8x64xf32> -> vector<8x64xf32>
    %c0_3 = arith.constant 0 : index
    %c0_4 = arith.constant 0 : index
    %3 = vector.load %arg2[%c0_3, %c0_4] : memref<8x64xf32, #tpu.memory_space<vmem>>, vector<8x64xf32>
    tpu.vector_store %arg2[%c0_3, %c0_4], %2 {strides = array<i32>} : memref<8x64xf32, #tpu.memory_space<vmem>>, vector<8x64xf32>,
    return
  }
}

</mosaic_0001>

<llo_original>
// kernel: tpu_custom_call.1
$region0: #{tpu_custom_call.1}
  #allocation0 [shape = 'u32[]', space=smem, size = 0x4, offset = 0x4, fixed_abs, tag = 'smem constant byte address 0x4 - core index']
  #allocation1 [shape = 'u32[144,128]{1,0:T(1,128)}', space=vmem, size = 0x12000, scoped, tag = 'internal scratch']
  %s0 = inlined_call_operand.vmem [shape: f32[8,32], index: 0, kind: input, shape index: {}]
  %s1 = inlined_call_operand.vmem [shape: f32[64,32], index: 1, kind: input, shape index: {}]
  %s2 = inlined_call_operand.hbm [shape: f32[8,64], index: 2, kind: output, shape index: {}]
  %s3 = sld [smem:[#allocation0]]
  $region18: #{tpu_custom_call.1} parent=0
    _
  %s5 = ssub.s32 1, %s3
  %s6 = scalar_select 0, %s5, %s3
  $region1: #{tpu_custom_call.1} parent=0
    #allocation2 [shape = 'u8[4096]{0}', space=vmem, size = 0x1000, scoped, tag = 'output window, operand 0, single buffered']
    #allocation3 [shape = 's32[1]{0}', space=sflag, size = 0x4, scoped, tag = 'scoped memory for tpu_custom_call.1']
    %7 = vsyncpa [#allocation3], 0
    // Predicated region
    $region2: #{tpu_custom_call.1} parent=1 // pred_check
      _
    $region3: #{tpu_custom_call.1} parent=1 // pred_check_branch
      %9 = sbr.rel (0) target = $region5
    $region4: #{tpu_custom_call.1} parent=1 // pred_region
      _
    $region5: #{tpu_custom_call.1} parent=1 // pred_fallthru
      _
    // Predicated region
    $region6: #{tpu_custom_call.1} parent=1 // pred_check
      _
    $region7: #{tpu_custom_call.1} parent=1 // pred_check_branch
      %11 = sbr.rel (0) target = $region9
    $region8: #{tpu_custom_call.1} parent=1 // pred_region
      _
    $region9: #{tpu_custom_call.1} parent=1 // pred_fallthru
      _
    %v12 = vld [vmem:[%s0] sm:$0xff]
    %v13 = vld [vmem:[%s1] sm:$0xff]
    %v14 = vld [vmem:[%s1 + $0x8] sm:$0xff]
    %v15 = vld [vmem:[%s1 + $0x10] sm:$0xff]
    %v16 = vld [vmem:[%s1 + $0x18] sm:$0xff]
    %v17 = vld [vmem:[%s1 + $0x20] sm:$0xff]
    %v18 = vld [vmem:[%s1 + $0x28] sm:$0xff]
    %v19 = vld [vmem:[%s1 + $0x30] sm:$0xff]
    %v20 = vld [vmem:[%s1 + $0x38] sm:$0xff]
    %vm21 = vcmask 261120
    %v23 = vsel %vm21, %v12, 0
    %v26 = vsel %vm21, %v13, 0
    %v29 = vsel %vm21, %v14, 0
    %v32 = vsel %vm21, %v15, 0
    %v35 = vsel %vm21, %v16, 0
    %v38 = vsel %vm21, %v17, 0
    %v41 = vsel %vm21, %v18, 0
    %v44 = vsel %vm21, %v19, 0
    %v47 = vsel %vm21, %v20, 0
    %49 = vmatprep.subr.mxu0 0.0
    %50 = vmatpush1.xpose.msra.mxu0 %v26
    %51 = vmatprep.subr.mxu0 0.0
    %52 = vmatpush1.xpose.msra.mxu0 %v29
    %53 = vmatprep.subr.mxu0 0.0
    %54 = vmatpush1.xpose.msra.mxu0 %v32
    %55 = vmatprep.subr.mxu0 0.0
    %56 = vmatpush1.xpose.msra.mxu0 %v35
    %57 = vmatprep.subr.mxu0 0.0
    %58 = vmatpush1.xpose.msra.mxu0 %v38
    %59 = vmatprep.subr.mxu0 0.0
    %60 = vmatpush1.xpose.msra.mxu0 %v41
    %61 = vmatprep.subr.mxu0 0.0
    %62 = vmatpush1.xpose.msra.mxu0 %v44
    %63 = vmatprep.subr.mxu0 0.0
    %64 = vmatpush1.xpose.msra.mxu0 %v47
    %65 = vmatprep.subr.mxu0 0.0
    %66 = vmatpush1.xpose.msra.mxu0 0.0
    %67 = vmatprep.subr.mxu0 0.0
    %68 = vmatpush1.xpose.msra.mxu0 0.0
    %69 = vmatprep.subr.mxu0 0.0
    %70 = vmatpush1.xpose.msra.mxu0 0.0
    %71 = vmatprep.subr.mxu0 0.0
    %72 = vmatpush1.xpose.msra.mxu0 0.0
    %73 = vmatprep.subr.mxu0 0.0
    %74 = vmatpush1.xpose.msra.mxu0 0.0
    %75 = vmatprep.subr.mxu0 0.0
    %76 = vmatpush1.xpose.msra.mxu0 0.0
    %77 = vmatprep.subr.mxu0 0.0
    %78 = vmatpush1.xpose.msra.mxu0 0.0
    %79 = vmatprep.subr.mxu0 0.0
    %80 = vmatpush1.xpose.msra.mxu0 0.0
    %81 = vmatprep.subr.mxu0 0.0
    %82 = vmatpush1.xpose.msra.mxu0 0.0
    %83 = vmatprep.subr.mxu0 0.0
    %84 = vmatpush1.xpose.msra.mxu0 0.0
    %85 = vmatprep.subr.mxu0 0.0
    %86 = vmatpush1.xpose.msra.mxu0 0.0
    %87 = vmatprep.subr.mxu0 0.0
    %88 = vmatpush1.xpose.msra.mxu0 0.0
    %89 = vmatprep.subr.mxu0 0.0
    %90 = vmatpush1.xpose.msra.mxu0 0.0
    %91 = vmatprep.subr.mxu0 0.0
    %92 = vmatpush1.xpose.msra.mxu0 0.0
    %93 = vmatprep.subr.mxu0 0.0
    %94 = vmatpush1.xpose.msra.mxu0 0.0
    %95 = vmatprep.subr.mxu0 0.0
    %96 = vmatpush1.xpose.msra.mxu0 0.0
    %97 = vmatprep.subr.mxu0 0.0
    %98 = vmatpush1.xpose.msra.mxu0 0.0
    %99 = vmatprep.subr.mxu0 0.0
    %100 = vmatpush1.xpose.msra.mxu0 0.0
    %101 = vmatprep.subr.mxu0 0.0
    %102 = vmatpush1.xpose.msra.mxu0 0.0
    %103 = vmatprep.subr.mxu0 0.0
    %104 = vmatpush1.xpose.msra.mxu0 0.0
    %105 = vmatprep.subr.mxu0 0.0
    %106 = vmatpush1.xpose.msra.mxu0 0.0
    %107 = vmatprep.subr.mxu0 0.0
    %108 = vmatpush1.xpose.msra.mxu0 0.0
    %109 = vmatprep.subr.mxu0 0.0
    %110 = vmatpush1.xpose.msra.mxu0 0.0
    %111 = vmatprep.subr.mxu0 0.0
    %112 = vmatpush1.xpose.msra.mxu0 0.0
    %113 = vmatprep.mubr.f32.mxu0 0.0
    %114 = vmatmul.mubr.f32.gmra.mrb[0].mxu0 %v23
    %v115 = vpop.f32.mrb[0].mxu0
    %v116 = vadd.f32 0.0, %v115
    %v117 = vpop.f32.mrb[0].mxu0
    %118 = vdwg.mxu0
    %vm119 = vcmask 523264
    %120 = vst.msk [vmem:[#allocation2] sm:$0xff] %vm119, %v116
    // Predicated region
    $region10: #{tpu_custom_call.1} parent=1 // pred_check
      _
    $region11: #{tpu_custom_call.1} parent=1 // pred_check_branch
      %122 = sbr.rel (0) target = $region13
    $region12: #{tpu_custom_call.1} parent=1 // pred_region
      %s124 = ssub.s32 128, 128
      %125 = vsyncadd [#allocation3], %s124
      %s127 = sshll.u32 [#allocation2], 4
      %s128 = int_to_ptr.vmem [resolvable:$true] %s127
      %130 = dma.vmem_to_hbm [thread:$0]  %s128, 128, %s2, [#allocation3]
    $region13: #{tpu_custom_call.1} parent=1 // pred_fallthru
      _
    // Predicated region
    $region14: #{tpu_custom_call.1} parent=1 // pred_check
      _
    $region15: #{tpu_custom_call.1} parent=1 // pred_check_branch
      %132 = sbr.rel (0) target = $region17
    $region16: #{tpu_custom_call.1} parent=1 // pred_region
      %133 = dma.done [#allocation3], 128
    $region17: #{tpu_custom_call.1} parent=1 // pred_fallthru
      _
    %134 = vsyncpa [#allocation3], 1

</llo_original>
